<compile_context>
chip_gen: v5e
topology: v5e:2x2
jax: 0.10.0
libtpu: 0.0.40
codegen_flags: <defaults>
</compile_context>

<pallas_src>
import functools
import math

import jax
import jax.numpy as jnp
from jax.experimental import pallas as pl
from jax.experimental.pallas import tpu as pltpu


def _lstm_cell_kernel(x_ref, h_ref, c_ref, wx_ref, wh_ref, b_ref,
                      h_out_ref, c_out_ref):
    """One (hidden_tile, batch_tile) block of the fused LSTM cell.

    x_ref : (Bt, in)      input activations (input dtype, cast in-kernel)
    h_ref : (Bt, H)       previous hidden state
    c_ref : (Bt, Ht)      previous cell state tile (f32)
    wx_ref: (4, in, Ht)   per-gate input weights, gate order [i, f, g, o]
    wh_ref: (4, H, Ht)    per-gate hidden weights
    b_ref : (4, 1, Ht)    fused bias (bi + bh), float32
    """
    cdt = wx_ref.dtype
    x = x_ref[...].astype(cdt)
    h = h_ref[...].astype(cdt)

    def gate(g):
        # Two MXU matmuls per gate, f32 accumulation; bias broadcasts over batch.
        acc = jnp.dot(x, wx_ref[g], preferred_element_type=jnp.float32)
        acc = acc + jnp.dot(h, wh_ref[g], preferred_element_type=jnp.float32)
        return acc + b_ref[g]

    i_gate = jax.nn.sigmoid(gate(0))
    f_gate = jax.nn.sigmoid(gate(1))
    g_gate = jnp.tanh(gate(2))
    o_gate = jax.nn.sigmoid(gate(3))

    c_next = f_gate * c_ref[...].astype(jnp.float32) + i_gate * g_gate
    h_next = o_gate * jnp.tanh(c_next)

    h_out_ref[...] = h_next.astype(h_out_ref.dtype)
    c_out_ref[...] = c_next.astype(c_out_ref.dtype)


def prepare_lstm_weights(Wi, Wh, bi, bh, compute_dtype=jnp.bfloat16):
    """One-time re-layout of the PyTorch-style parameters.

    Wi: (4H, input_size), Wh: (4H, H), bi/bh: (4H,).
    Returns Wx4: (4, input_size, H), Wh4: (4, H, H) in compute_dtype and
    b4: (4, 1, H) float32.  Gate order matches torch.chunk(4, dim=1): [i,f,g,o].
    """
    four_h, input_size = Wi.shape
    H = Wh.shape[-1]
    assert four_h == 4 * H and Wh.shape[0] == 4 * H
    Wx4 = Wi.reshape(4, H, input_size).transpose(0, 2, 1)   # (4, in, H)
    Wh4 = Wh.reshape(4, H, H).transpose(0, 2, 1)             # (4, H, H)
    if compute_dtype is not None:
        Wx4 = Wx4.astype(compute_dtype)
        Wh4 = Wh4.astype(compute_dtype)
    b4 = (bi.astype(jnp.float32) + bh.astype(jnp.float32)).reshape(4, 1, H)
    return Wx4, Wh4, b4


def _vmem_capacity_bytes():
    """Physical per-core VMEM; fall back to the v7x 64 MiB lower bound."""
    try:
        return int(pltpu.get_tpu_info().vmem_capacity_bytes)
    except Exception:
        return 64 << 20


def _pick_tile(dim, preferred, align):
    """Largest divisor of `dim` that is a multiple of `align` and <= preferred;
    falls back to the full dim (always a legal block shape)."""
    if dim % align != 0 or dim <= align:
        return dim
    t = (min(preferred, dim) // align) * align
    while t >= align:
        if dim % t == 0:
            return t
        t -= align
    return dim


def lstm_cell(x, h_prev, c_prev, Wx4, Wh4, b4, *, block_b=None, block_h=None):
    """Single LSTM-cell step.  x: (B, in), h_prev/c_prev: (B, H).

    Returns (h_next, c_next); h_next in x.dtype, c_next carried in float32.
    """
    B, in_size = x.shape
    H = h_prev.shape[-1]
    assert Wx4.shape == (4, in_size, H) and Wh4.shape == (4, H, H)

    w_bytes = jnp.dtype(Wx4.dtype).itemsize
    act_bytes = jnp.dtype(x.dtype).itemsize
    h_dtype = x.dtype
    c_dtype = jnp.float32   # keep the cell state in f32 even for bf16 compute

    # --- generation-aware VMEM budget (~80% of physical, 32 MiB floor) -------
    vmem_cap = _vmem_capacity_bytes()
    vmem_budget = max(min(int(vmem_cap * 0.8), 112 << 20), 32 << 20)

    # --- hidden tile ----------------------------------------------------------
    if block_h is None:
        # Bigger tiles on 128 MiB parts (v5e/v6e), conservative on v7x (64 MiB).
        block_h = 512 if vmem_cap >= (96 << 20) else 256
    Ht = _pick_tile(H, block_h, 128)
    # Ensure >= 2 hidden tiles when H allows, so both v7x TCs get parallel work.
    if Ht == H and H >= 256 and H % 256 == 0:
        Ht = H // 2
    # Shrink Ht while the double-buffered weight slab would crowd the budget.
    def _w_block_bytes(ht):
        return 2 * 4 * (in_size + H) * ht * w_bytes
    while (Ht > 128 and (Ht // 2) % 128 == 0 and H % (Ht // 2) == 0
           and _w_block_bytes(Ht) > int(0.6 * vmem_budget)):
        Ht //= 2
    nh = H // Ht

    # --- batch tile -----------------------------------------------------------
    if block_b is None:
        # Full batch by default: the x/h block indices become grid-invariant and
        # the activations are DMA'd from HBM exactly once.
        xh_bytes = B * (in_size + H) * act_bytes
        block_b = B if xh_bytes <= (8 << 20) else 256
    b_align = 128 if (B % 128 == 0 and block_b >= 128) else 8
    Bt = _pick_tile(B, block_b, b_align)
    nb = B // Bt

    # Inner grid axis = batch: the weight block index is constant across the
    # inner loop, so the weight tile stays resident in VMEM.
    grid = (nh, nb)

    in_specs = [
        pl.BlockSpec((Bt, in_size), lambda j, i: (i, 0)),        # x
        pl.BlockSpec((Bt, H), lambda j, i: (i, 0)),              # h_prev
        pl.BlockSpec((Bt, Ht), lambda j, i: (i, j)),             # c_prev
        pl.BlockSpec((4, in_size, Ht), lambda j, i: (0, 0, j)),  # Wx4
        pl.BlockSpec((4, H, Ht), lambda j, i: (0, 0, j)),        # Wh4
        pl.BlockSpec((4, 1, Ht), lambda j, i: (0, 0, j)),        # b4
    ]
    out_specs = (
        pl.BlockSpec((Bt, Ht), lambda j, i: (i, j)),             # h_next
        pl.BlockSpec((Bt, Ht), lambda j, i: (i, j)),             # c_next
    )

    # Per-step footprint with the double buffer counted exactly once.
    est = 2 * (
        Bt * in_size * act_bytes          # x block
        + Bt * H * act_bytes              # h block
        + Bt * Ht * 4                     # c block (f32)
        + 4 * in_size * Ht * w_bytes      # Wx block
        + 4 * H * Ht * w_bytes            # Wh block
        + 4 * Ht * 4                      # bias block
        + Bt * Ht * jnp.dtype(h_dtype).itemsize
        + Bt * Ht * 4                     # c out (f32)
    )
    vmem_limit = int(min(max(est + (4 << 20), 32 << 20), vmem_budget))

    # Alias c_prev -> c_next when dtypes match.  Callers that donate c_prev
    # (jit donate_argnums / scan carry) avoid the defensive copy entirely.
    c_prev_in = c_prev
    io_aliases = {2: 1} if c_prev.dtype == c_dtype else {}

    h_next, c_next = pl.pallas_call(
        _lstm_cell_kernel,
        out_shape=(
            jax.ShapeDtypeStruct((B, H), h_dtype),
            jax.ShapeDtypeStruct((B, H), c_dtype),
        ),
        grid=grid,
        in_specs=in_specs,
        out_specs=out_specs,
        input_output_aliases=io_aliases,
        compiler_params=pltpu.CompilerParams(
            dimension_semantics=("parallel", "parallel"),
            vmem_limit_bytes=vmem_limit,
        ),
    )(x, h_prev, c_prev_in, Wx4, Wh4, b4)
    return h_next, c_next


def init_params(key, input_size, hidden_size, dtype=jnp.float32):
    """Deterministic init mirroring LSTM_Cell.reset_parameters (uniform +/- 1/sqrt(H))."""
    stdv = 1.0 / math.sqrt(hidden_size) if hidden_size > 0 else 0.0
    k1, k2, k3, k4 = jax.random.split(key, 4)
    Wi = jax.random.uniform(k1, (4 * hidden_size, input_size), dtype, -stdv, stdv)
    Wh = jax.random.uniform(k2, (4 * hidden_size, hidden_size), dtype, -stdv, stdv)
    bi = jax.random.uniform(k3, (4 * hidden_size,), dtype, -stdv, stdv)
    bh = jax.random.uniform(k4, (4 * hidden_size,), dtype, -stdv, stdv)
    return Wi, Wh, bi, bh


def lstm_cell_ref(x, h_prev, c_prev, Wi, Wh, bi, bh):
    """Pure-JAX reference matching the PyTorch forward."""
    gates = x @ Wi.T + bi + h_prev @ Wh.T + bh
    H = h_prev.shape[-1]
    i, f, g, o = (gates[:, 0:H], gates[:, H:2 * H],
                  gates[:, 2 * H:3 * H], gates[:, 3 * H:4 * H])
    i = jax.nn.sigmoid(i)
    f = jax.nn.sigmoid(f)
    g = jnp.tanh(g)
    o = jax.nn.sigmoid(o)
    c_next = f * c_prev + i * g
    h_next = o * jnp.tanh(c_next)
    return h_next, c_next


if __name__ == "__main__":
    def check(input_size, hidden_size, batch, key, compute_dtype, atol, rtol,
              **tile_kwargs):
        kp, kx, kh, kc = jax.random.split(key, 4)
        Wi, Wh, bi, bh = init_params(kp, input_size, hidden_size)
        x = jax.random.normal(kx, (batch, input_size), jnp.float32)
        h_prev = jax.random.normal(kh, (batch, hidden_size), jnp.float32)
        c_prev = jax.random.normal(kc, (batch, hidden_size), jnp.float32)

        # One-time weight re-layout (would be done at init time in real use).
        Wx4, Wh4, b4 = prepare_lstm_weights(Wi, Wh, bi, bh,
                                            compute_dtype=compute_dtype)

        step = jax.jit(functools.partial(lstm_cell, **tile_kwargs))
        h_next, c_next = step(x, h_prev, c_prev, Wx4, Wh4, b4)
        jax.block_until_ready((h_next, c_next))

        h_ref, c_ref = lstm_cell_ref(x, h_prev, c_prev, Wi, Wh, bi, bh)
        assert jnp.allclose(h_next.astype(jnp.float32), h_ref, atol=atol, rtol=rtol), \
            f"h mismatch (H={hidden_size})"
        assert jnp.allclose(c_next.astype(jnp.float32), c_ref, atol=atol, rtol=rtol), \
            f"c mismatch (H={hidden_size})"

    key = jax.random.PRNGKey(0)
    k_small, k_tiled = jax.random.split(key)

    # Small shape implied by the module spec, full-precision path (full-block
    # fallback tiling, exact-math check).
    check(input_size=16, hidden_size=32, batch=2, key=k_small,
          compute_dtype=jnp.float32, atol=1e-4, rtol=1e-4)

    # (8,128)-aligned shape exercising the hidden-tiled grid path with the
    # default bf16 compute dtype (weight stream is the HBM-bound quantity).
    check(input_size=64, hidden_size=256, batch=16, key=k_tiled,
          compute_dtype=jnp.bfloat16, atol=5e-2, rtol=5e-2)

    print("KERNEL_OK")
</pallas_src>

<mosaic_0001>
module attributes {stable_mosaic.version = 11 : i64} {
  func.func @_lstm_cell_kernel(%arg0: i32, %arg1: i32, %arg2: memref<2x16xf32, #tpu.memory_space<vmem>>, %arg3: memref<2x32xf32, #tpu.memory_space<vmem>>, %arg4: memref<2x32xf32, #tpu.memory_space<vmem>>, %arg5: memref<4x16x32xf32, #tpu.memory_space<vmem>>, %arg6: memref<4x32x32xf32, #tpu.memory_space<vmem>>, %arg7: memref<4x1x32xf32, #tpu.memory_space<vmem>>, %arg8: memref<2x32xf32, #tpu.memory_space<vmem>>, %arg9: memref<2x32xf32, #tpu.memory_space<vmem>>) attributes {dimension_semantics = [#tpu.dimension_semantics<parallel>, #tpu.dimension_semantics<parallel>], iteration_bounds = array<i64: 1, 1>, scalar_prefetch = 0 : i64, scratch_operands = 0 : i64, tpu.core_type = #tpu.core_type<tc>, window_params = [{transform_indices = @transform_0, window_bounds = array<i64: 2, 16>}, {transform_indices = @transform_1, window_bounds = array<i64: 2, 32>}, {transform_indices = @transform_2, window_bounds = array<i64: 2, 32>}, {transform_indices = @transform_3, window_bounds = array<i64: 4, 16, 32>}, {transform_indices = @transform_4, window_bounds = array<i64: 4, 32, 32>}, {transform_indices = @transform_5, window_bounds = array<i64: 4, 1, 32>}, {transform_indices = @transform_6, window_bounds = array<i64: 2, 32>}, {transform_indices = @transform_7, window_bounds = array<i64: 2, 32>}]} {
    %c0 = arith.constant 0 : index
    %c0_0 = arith.constant 0 : index
    %0 = vector.load %arg2[%c0, %c0_0] : memref<2x16xf32, #tpu.memory_space<vmem>>, vector<2x16xf32>
    %c0_1 = arith.constant 0 : index
    %c0_2 = arith.constant 0 : index
    %1 = vector.load %arg3[%c0_1, %c0_2] : memref<2x32xf32, #tpu.memory_space<vmem>>, vector<2x32xf32>
    %c0_3 = arith.constant 0 : index
    %c0_4 = arith.constant 0 : index
    %c0_5 = arith.constant 0 : index
    %2 = vector.load %arg5[%c0_3, %c0_4, %c0_5] : memref<4x16x32xf32, #tpu.memory_space<vmem>>, vector<1x16x32xf32>
    %3 = vector.shape_cast %2 : vector<1x16x32xf32> to vector<16x32xf32>
    %cst = arith.constant dense<0.000000e+00> : vector<2x32xf32>
    %4 = tpu.matmul %0, %3, %cst {dimension_numbers = #tpu.dot_dimension_numbers<[1], [0], [0], [1], [0, 0, 1, 1], [], []>} : vector<2x16xf32>, vector<16x32xf32>, vector<2x32xf32> -> vector<2x32xf32>
    %c0_6 = arith.constant 0 : index
    %c0_7 = arith.constant 0 : index
    %c0_8 = arith.constant 0 : index
    %5 = vector.load %arg6[%c0_6, %c0_7, %c0_8] : memref<4x32x32xf32, #tpu.memory_space<vmem>>, vector<1x32x32xf32>
    %6 = vector.shape_cast %5 : vector<1x32x32xf32> to vector<32x32xf32>
    %cst_9 = arith.constant dense<0.000000e+00> : vector<2x32xf32>
    %7 = tpu.matmul %1, %6, %cst_9 {dimension_numbers = #tpu.dot_dimension_numbers<[1], [0], [0], [1], [0, 0, 1, 1], [], []>} : vector<2x32xf32>, vector<32x32xf32>, vector<2x32xf32> -> vector<2x32xf32>
    %8 = arith.addf %4, %7 : vector<2x32xf32>
    %c0_10 = arith.constant 0 : index
    %c0_11 = arith.constant 0 : index
    %c0_12 = arith.constant 0 : index
    %9 = vector.load %arg7[%c0_10, %c0_11, %c0_12] : memref<4x1x32xf32, #tpu.memory_space<vmem>>, vector<1x1x32xf32>
    %10 = vector.shape_cast %9 : vector<1x1x32xf32> to vector<1x32xf32>
    %11 = vector.broadcast %10 : vector<1x32xf32> to vector<2x32xf32>
    %12 = arith.addf %8, %11 : vector<2x32xf32>
    %13 = arith.negf %12 : vector<2x32xf32>
    %14 = math.exp %13 : vector<2x32xf32>
    %cst_13 = arith.constant 1.000000e+00 : f32
    %15 = vector.broadcast %cst_13 : f32 to vector<2x32xf32>
    %16 = arith.addf %15, %14 : vector<2x32xf32>
    %17 = arith.divf %15, %16 : vector<2x32xf32>
    %c1 = arith.constant 1 : index
    %c0_14 = arith.constant 0 : index
    %c0_15 = arith.constant 0 : index
    %18 = vector.load %arg5[%c1, %c0_14, %c0_15] : memref<4x16x32xf32, #tpu.memory_space<vmem>>, vector<1x16x32xf32>
    %19 = vector.shape_cast %18 : vector<1x16x32xf32> to vector<16x32xf32>
    %cst_16 = arith.constant dense<0.000000e+00> : vector<2x32xf32>
    %20 = tpu.matmul %0, %19, %cst_16 {dimension_numbers = #tpu.dot_dimension_numbers<[1], [0], [0], [1], [0, 0, 1, 1], [], []>} : vector<2x16xf32>, vector<16x32xf32>, vector<2x32xf32> -> vector<2x32xf32>
    %c1_17 = arith.constant 1 : index
    %c0_18 = arith.constant 0 : index
    %c0_19 = arith.constant 0 : index
    %21 = vector.load %arg6[%c1_17, %c0_18, %c0_19] : memref<4x32x32xf32, #tpu.memory_space<vmem>>, vector<1x32x32xf32>
    %22 = vector.shape_cast %21 : vector<1x32x32xf32> to vector<32x32xf32>
    %cst_20 = arith.constant dense<0.000000e+00> : vector<2x32xf32>
    %23 = tpu.matmul %1, %22, %cst_20 {dimension_numbers = #tpu.dot_dimension_numbers<[1], [0], [0], [1], [0, 0, 1, 1], [], []>} : vector<2x32xf32>, vector<32x32xf32>, vector<2x32xf32> -> vector<2x32xf32>
    %24 = arith.addf %20, %23 : vector<2x32xf32>
    %c1_21 = arith.constant 1 : index
    %c0_22 = arith.constant 0 : index
    %c0_23 = arith.constant 0 : index
    %25 = vector.load %arg7[%c1_21, %c0_22, %c0_23] : memref<4x1x32xf32, #tpu.memory_space<vmem>>, vector<1x1x32xf32>
    %26 = vector.shape_cast %25 : vector<1x1x32xf32> to vector<1x32xf32>
    %27 = vector.broadcast %26 : vector<1x32xf32> to vector<2x32xf32>
    %28 = arith.addf %24, %27 : vector<2x32xf32>
    %29 = arith.negf %28 : vector<2x32xf32>
    %30 = math.exp %29 : vector<2x32xf32>
    %cst_24 = arith.constant 1.000000e+00 : f32
    %31 = vector.broadcast %cst_24 : f32 to vector<2x32xf32>
    %32 = arith.addf %31, %30 : vector<2x32xf32>
    %33 = arith.divf %31, %32 : vector<2x32xf32>
    %c2 = arith.constant 2 : index
    %c0_25 = arith.constant 0 : index
    %c0_26 = arith.constant 0 : index
    %34 = vector.load %arg5[%c2, %c0_25, %c0_26] : memref<4x16x32xf32, #tpu.memory_space<vmem>>, vector<1x16x32xf32>
    %35 = vector.shape_cast %34 : vector<1x16x32xf32> to vector<16x32xf32>
    %cst_27 = arith.constant dense<0.000000e+00> : vector<2x32xf32>
    %36 = tpu.matmul %0, %35, %cst_27 {dimension_numbers = #tpu.dot_dimension_numbers<[1], [0], [0], [1], [0, 0, 1, 1], [], []>} : vector<2x16xf32>, vector<16x32xf32>, vector<2x32xf32> -> vector<2x32xf32>
    %c2_28 = arith.constant 2 : index
    %c0_29 = arith.constant 0 : index
    %c0_30 = arith.constant 0 : index
    %37 = vector.load %arg6[%c2_28, %c0_29, %c0_30] : memref<4x32x32xf32, #tpu.memory_space<vmem>>, vector<1x32x32xf32>
    %38 = vector.shape_cast %37 : vector<1x32x32xf32> to vector<32x32xf32>
    %cst_31 = arith.constant dense<0.000000e+00> : vector<2x32xf32>
    %39 = tpu.matmul %1, %38, %cst_31 {dimension_numbers = #tpu.dot_dimension_numbers<[1], [0], [0], [1], [0, 0, 1, 1], [], []>} : vector<2x32xf32>, vector<32x32xf32>, vector<2x32xf32> -> vector<2x32xf32>
    %40 = arith.addf %36, %39 : vector<2x32xf32>
    %c2_32 = arith.constant 2 : index
    %c0_33 = arith.constant 0 : index
    %c0_34 = arith.constant 0 : index
    %41 = vector.load %arg7[%c2_32, %c0_33, %c0_34] : memref<4x1x32xf32, #tpu.memory_space<vmem>>, vector<1x1x32xf32>
    %42 = vector.shape_cast %41 : vector<1x1x32xf32> to vector<1x32xf32>
    %43 = vector.broadcast %42 : vector<1x32xf32> to vector<2x32xf32>
    %44 = arith.addf %40, %43 : vector<2x32xf32>
    %45 = math.tanh %44 : vector<2x32xf32>
    %c3 = arith.constant 3 : index
    %c0_35 = arith.constant 0 : index
    %c0_36 = arith.constant 0 : index
    %46 = vector.load %arg5[%c3, %c0_35, %c0_36] : memref<4x16x32xf32, #tpu.memory_space<vmem>>, vector<1x16x32xf32>
    %47 = vector.shape_cast %46 : vector<1x16x32xf32> to vector<16x32xf32>
    %cst_37 = arith.constant dense<0.000000e+00> : vector<2x32xf32>
    %48 = tpu.matmul %0, %47, %cst_37 {dimension_numbers = #tpu.dot_dimension_numbers<[1], [0], [0], [1], [0, 0, 1, 1], [], []>} : vector<2x16xf32>, vector<16x32xf32>, vector<2x32xf32> -> vector<2x32xf32>
    %c3_38 = arith.constant 3 : index
    %c0_39 = arith.constant 0 : index
    %c0_40 = arith.constant 0 : index
    %49 = vector.load %arg6[%c3_38, %c0_39, %c0_40] : memref<4x32x32xf32, #tpu.memory_space<vmem>>, vector<1x32x32xf32>
    %50 = vector.shape_cast %49 : vector<1x32x32xf32> to vector<32x32xf32>
    %cst_41 = arith.constant dense<0.000000e+00> : vector<2x32xf32>
    %51 = tpu.matmul %1, %50, %cst_41 {dimension_numbers = #tpu.dot_dimension_numbers<[1], [0], [0], [1], [0, 0, 1, 1], [], []>} : vector<2x32xf32>, vector<32x32xf32>, vector<2x32xf32> -> vector<2x32xf32>
    %52 = arith.addf %48, %51 : vector<2x32xf32>
    %c3_42 = arith.constant 3 : index
    %c0_43 = arith.constant 0 : index
    %c0_44 = arith.constant 0 : index
    %53 = vector.load %arg7[%c3_42, %c0_43, %c0_44] : memref<4x1x32xf32, #tpu.memory_space<vmem>>, vector<1x1x32xf32>
    %54 = vector.shape_cast %53 : vector<1x1x32xf32> to vector<1x32xf32>
    %55 = vector.broadcast %54 : vector<1x32xf32> to vector<2x32xf32>
    %56 = arith.addf %52, %55 : vector<2x32xf32>
    %57 = arith.negf %56 : vector<2x32xf32>
    %58 = math.exp %57 : vector<2x32xf32>
    %cst_45 = arith.constant 1.000000e+00 : f32
    %59 = vector.broadcast %cst_45 : f32 to vector<2x32xf32>
    %60 = arith.addf %59, %58 : vector<2x32xf32>
    %61 = arith.divf %59, %60 : vector<2x32xf32>
    %c0_46 = arith.constant 0 : index
    %c0_47 = arith.constant 0 : index
    %62 = vector.load %arg4[%c0_46, %c0_47] : memref<2x32xf32, #tpu.memory_space<vmem>>, vector<2x32xf32>
    %63 = arith.mulf %33, %62 : vector<2x32xf32>
    %64 = arith.mulf %17, %45 : vector<2x32xf32>
    %65 = arith.addf %63, %64 : vector<2x32xf32>
    %66 = math.tanh %65 : vector<2x32xf32>
    %67 = arith.mulf %61, %66 : vector<2x32xf32>
    %c0_48 = arith.constant 0 : index
    %c0_49 = arith.constant 0 : index
    %68 = vector.load %arg8[%c0_48, %c0_49] : memref<2x32xf32, #tpu.memory_space<vmem>>, vector<2x32xf32>
    tpu.vector_store %arg8[%c0_48, %c0_49], %67 {strides = array<i32>} : memref<2x32xf32, #tpu.memory_space<vmem>>, vector<2x32xf32>,
    %c0_50 = arith.constant 0 : index
    %c0_51 = arith.constant 0 : index
    %69 = vector.load %arg9[%c0_50, %c0_51] : memref<2x32xf32, #tpu.memory_space<vmem>>, vector<2x32xf32>
    tpu.vector_store %arg9[%c0_50, %c0_51], %65 {strides = array<i32>} : memref<2x32xf32, #tpu.memory_space<vmem>>, vector<2x32xf32>,
    return
  }
  func.func @transform_0(%arg0: i32, %arg1: i32) -> (i32, i32) {
    %c0_i32 = arith.constant 0 : i32
    %c0_i32_0 = arith.constant 0 : i32
    return %arg1, %c0_i32 : i32, i32
  }
  func.func @transform_1(%arg0: i32, %arg1: i32) -> (i32, i32) {
    %c0_i32 = arith.constant 0 : i32
    %c0_i32_0 = arith.constant 0 : i32
    return %arg1, %c0_i32 : i32, i32
  }
  func.func @transform_2(%arg0: i32, %arg1: i32) -> (i32, i32) {
    %c0_i32 = arith.constant 0 : i32
    return %arg1, %arg0 : i32, i32
  }
  func.func @transform_3(%arg0: i32, %arg1: i32) -> (i32, i32, i32) {
    %c0_i32 = arith.constant 0 : i32
    %c0_i32_0 = arith.constant 0 : i32
    %c0_i32_1 = arith.constant 0 : i32
    return %c0_i32, %c0_i32_0, %arg0 : i32, i32, i32
  }
  func.func @transform_4(%arg0: i32, %arg1: i32) -> (i32, i32, i32) {
    %c0_i32 = arith.constant 0 : i32
    %c0_i32_0 = arith.constant 0 : i32
    %c0_i32_1 = arith.constant 0 : i32
    return %c0_i32, %c0_i32_0, %arg0 : i32, i32, i32
  }
  func.func @transform_5(%arg0: i32, %arg1: i32) -> (i32, i32, i32) {
    %c0_i32 = arith.constant 0 : i32
    %c0_i32_0 = arith.constant 0 : i32
    %c0_i32_1 = arith.constant 0 : i32
    return %c0_i32, %c0_i32_0, %arg0 : i32, i32, i32
  }
  func.func @transform_6(%arg0: i32, %arg1: i32) -> (i32, i32) {
    %c0_i32 = arith.constant 0 : i32
    return %arg1, %arg0 : i32, i32
  }
  func.func @transform_7(%arg0: i32, %arg1: i32) -> (i32, i32) {
    %c0_i32 = arith.constant 0 : i32
    return %arg1, %arg0 : i32, i32
  }
}

</mosaic_0001>

<llo_original>
// kernel: lstm_cell.1
$region0: #{lstm_cell.1}
  #allocation0 [shape = 'u32[]', space=smem, size = 0x4, offset = 0x4, fixed_abs, tag = 'smem constant byte address 0x4 - core index']
  #allocation1 [shape = 'u32[72,128]{1,0:T(1,128)}', space=vmem, size = 0x9000, scoped, tag = 'internal scratch']
  %s0 = inlined_call_operand.vmem [shape: f32[2,16], index: 0, kind: input, shape index: {}]
  %s1 = inlined_call_operand.hbm [shape: f32[2,32], index: 1, kind: input, shape index: {}]
  %s2 = inlined_call_operand.hbm [shape: f32[2,32], index: 2, kind: input, shape index: {}, may-alias: {2,7}]
  %s3 = inlined_call_operand.hbm [shape: f32[4,16,32], index: 3, kind: input, shape index: {}]
  %s4 = inlined_call_operand.hbm [shape: f32[4,32,32], index: 4, kind: input, shape index: {}]
  %s5 = inlined_call_operand.vmem [shape: f32[4,1,32], index: 5, kind: input, shape index: {}]
  %s6 = inlined_call_operand.hbm [shape: f32[2,32], index: 6, kind: output, shape index: {0}]
  %s7 = inlined_call_operand.hbm [shape: f32[2,32], index: 7, kind: output, shape index: {1}, may-alias: {2,7}]
  %8 = xla_tuple %s6, %s7
  %s9 = sld [smem:[#allocation0]]
  $region58: #{lstm_cell.1} parent=0
    _
  %s11 = ssub.s32 1, %s9
  %s12 = scalar_select 0, %s11, %s9
  $region1: #{lstm_cell.1} parent=0
    #allocation2 [shape = 'u8[1024]{0}', space=vmem, size = 0x400, scoped, tag = 'input window, operand 1, single buffered']
    #allocation3 [shape = 's32[1]{0}', space=sflag, size = 0x4, scoped, tag = 'scoped memory for lstm_cell.1']
    #allocation4 [shape = 's32[1]{0}', space=sflag, size = 0x4, scoped, tag = 'scoped memory for lstm_cell.1']
    #allocation5 [shape = 'u8[1024]{0}', space=vmem, size = 0x400, scoped, tag = 'input window, operand 2, single buffered']
    #allocation6 [shape = 's32[1]{0}', space=sflag, size = 0x4, scoped, tag = 'scoped memory for lstm_cell.1']
    #allocation7 [shape = 'u8[32768]{0}', space=vmem, size = 0x8000, scoped, tag = 'input window, operand 3, single buffered']
    #allocation8 [shape = 'u8[65536]{0}', space=vmem, size = 0x10000, scoped, tag = 'input window, operand 4, single buffered']
    #allocation9 [shape = 's32[1]{0}', space=sflag, size = 0x4, scoped, tag = 'scoped memory for lstm_cell.1']
    #allocation10 [shape = 'u8[1024]{0}', space=vmem, size = 0x400, scoped, tag = 'output window, operand 0, single buffered']
    #allocation11 [shape = 'u8[1024]{0}', space=vmem, size = 0x400, scoped, tag = 'output window, operand 1, single buffered']
    #allocation12 [shape = 's32[1]{0}', space=sflag, size = 0x4, scoped, tag = 'scoped memory for lstm_cell.1']
    %13 = vsyncpa [#allocation3], 0
    %14 = vsyncpa [#allocation6], 0
    %15 = vsyncpa [#allocation9], 0
    %16 = vsyncpa [#allocation4], 0
    %17 = vsyncpa [#allocation12], 0
    // Predicated region
    $region2: #{lstm_cell.1} parent=1 // pred_check
      _
    $region3: #{lstm_cell.1} parent=1 // pred_check_branch
      %19 = sbr.rel (0) target = $region5
    $region4: #{lstm_cell.1} parent=1 // pred_region
      _
    $region5: #{lstm_cell.1} parent=1 // pred_fallthru
      _
    // Predicated region
    $region6: #{lstm_cell.1} parent=1 // pred_check
      _
    $region7: #{lstm_cell.1} parent=1 // pred_check_branch
      %21 = sbr.rel (0) target = $region9
    $region8: #{lstm_cell.1} parent=1 // pred_region
      %23 = vsyncadd [#allocation3], 0
      %s25 = sshll.u32 %s1, 4
      %s26 = int_to_ptr.hbm [resolvable:$true] %s25
      %s27 = sshll.u32 [#allocation2], 4
      %s28 = int_to_ptr.vmem [resolvable:$true] %s27
      %30 = dma.hbm_to_vmem [thread:$0]  %s26, 32, %s28, [#allocation3]
    $region9: #{lstm_cell.1} parent=1 // pred_fallthru
      _
    // Predicated region
    $region10: #{lstm_cell.1} parent=1 // pred_check
      _
    $region11: #{lstm_cell.1} parent=1 // pred_check_branch
      %32 = sbr.rel (0) target = $region13
    $region12: #{lstm_cell.1} parent=1 // pred_region
      %34 = vsyncadd [#allocation6], 0
      %s36 = sshll.u32 %s2, 4
      %s37 = int_to_ptr.hbm [resolvable:$true] %s36
      %s38 = sshll.u32 [#allocation5], 4
      %s39 = int_to_ptr.vmem [resolvable:$true] %s38
      %41 = dma.hbm_to_vmem [thread:$0]  %s37, 32, %s39, [#allocation6]
    $region13: #{lstm_cell.1} parent=1 // pred_fallthru
      _
    // Predicated region
    $region14: #{lstm_cell.1} parent=1 // pred_check
      _
    $region15: #{lstm_cell.1} parent=1 // pred_check_branch
      %43 = sbr.rel (0) target = $region17
    $region16: #{lstm_cell.1} parent=1 // pred_region
      %45 = vsyncadd [#allocation6], 0
      %s46 = sshll.u32 %s3, 4
      %s47 = int_to_ptr.hbm [resolvable:$true] %s46
      %s48 = sshll.u32 [#allocation7], 4
      %s49 = int_to_ptr.vmem [resolvable:$true] %s48
      %54 = dma.hbm_to_vmem [thread:$0]  %s47, 1024, %s49, [#allocation6], 128, 128, 8
    $region17: #{lstm_cell.1} parent=1 // pred_fallthru
      _
    // Predicated region
    $region18: #{lstm_cell.1} parent=1 // pred_check
      _
    $region19: #{lstm_cell.1} parent=1 // pred_check_branch
      %56 = sbr.rel (0) target = $region21
    $region20: #{lstm_cell.1} parent=1 // pred_region
      %58 = vsyncadd [#allocation9], 0
      %s59 = sshll.u32 %s4, 4
      %s60 = int_to_ptr.hbm [resolvable:$true] %s59
      %s61 = sshll.u32 [#allocation8], 4
      %s62 = int_to_ptr.vmem [resolvable:$true] %s61
      %67 = dma.hbm_to_vmem [thread:$0]  %s60, 2048, %s62, [#allocation9], 128, 128, 8
    $region21: #{lstm_cell.1} parent=1 // pred_fallthru
      _
    // Predicated region
    $region22: #{lstm_cell.1} parent=1 // pred_check
      _
    $region23: #{lstm_cell.1} parent=1 // pred_check_branch
      %69 = sbr.rel (0) target = $region25
    $region24: #{lstm_cell.1} parent=1 // pred_region
      _
    $region25: #{lstm_cell.1} parent=1 // pred_fallthru
      _
    // Predicated region
    $region26: #{lstm_cell.1} parent=1 // pred_check
      _
    $region27: #{lstm_cell.1} parent=1 // pred_check_branch
      %71 = sbr.rel (0) target = $region29
    $region28: #{lstm_cell.1} parent=1 // pred_region
      %73 = dma.done [#allocation3], 32
    $region29: #{lstm_cell.1} parent=1 // pred_fallthru
      _
    // Predicated region
    $region30: #{lstm_cell.1} parent=1 // pred_check
      _
    $region31: #{lstm_cell.1} parent=1 // pred_check_branch
      %75 = sbr.rel (0) target = $region33
    $region32: #{lstm_cell.1} parent=1 // pred_region
      %77 = dma.done [#allocation6], 32
    $region33: #{lstm_cell.1} parent=1 // pred_fallthru
      _
    // Predicated region
    $region34: #{lstm_cell.1} parent=1 // pred_check
      _
    $region35: #{lstm_cell.1} parent=1 // pred_check_branch
      %79 = sbr.rel (0) target = $region37
    $region36: #{lstm_cell.1} parent=1 // pred_region
      %81 = dma.done [#allocation6], 1024
    $region37: #{lstm_cell.1} parent=1 // pred_fallthru
      _
    // Predicated region
    $region38: #{lstm_cell.1} parent=1 // pred_check
      _
    $region39: #{lstm_cell.1} parent=1 // pred_check_branch
      %83 = sbr.rel (0) target = $region41
    $region40: #{lstm_cell.1} parent=1 // pred_region
      %85 = dma.done [#allocation9], 2048
    $region41: #{lstm_cell.1} parent=1 // pred_fallthru
      _
    %v86 = vld [vmem:[%s0] sm:$0x3]
    %v87 = vld [vmem:[#allocation2] sm:$0x3]
    %v88 = vld [vmem:[#allocation7] sm:$0xff]
    %v89 = vld [vmem:[#allocation7 + $0x8] sm:$0xff]
    %v90 = vld [vmem:[#allocation8] sm:$0xff]
    %v91 = vld [vmem:[#allocation8 + $0x8] sm:$0xff]
    %v92 = vld [vmem:[#allocation8 + $0x10] sm:$0xff]
    %v93 = vld [vmem:[#allocation8 + $0x18] sm:$0xff]
    %vm94 = vcmask 261120
    %v96 = vsel %vm94, %v87, 0
    %98 = vmatpush.msra.mxu0 0.0
    %99 = vmatpush.msra.mxu0 0.0
    %100 = vmatpush.msra.mxu0 0.0
    %101 = vmatpush.msra.mxu0 0.0
    %102 = vmatpush.msra.mxu0 0.0
    %103 = vmatpush.msra.mxu0 0.0
    %104 = vmatpush.msra.mxu0 0.0
    %105 = vmatpush.msra.mxu0 0.0
    %106 = vmatpush.msra.mxu0 0.0
    %107 = vmatpush.msra.mxu0 0.0
    %108 = vmatpush.msra.mxu0 0.0
    %109 = vmatpush.msra.mxu0 0.0
    %110 = vmatpush.msra.mxu0 %v93
    %111 = vmatpush.msra.mxu0 %v92
    %112 = vmatpush.msra.mxu0 %v91
    %113 = vmatpush.msra.mxu0 %v90
    %114 = vmatmul.f32.gmra.mxu0 %v96
    %v115 = vpop.f32.mrf.mxu0
    %v116 = vadd.f32 0.0, %v115
    %117 = vdwg.mxu0
    %vm118 = vcmask 130048
    %v120 = vsel %vm118, %v86, 0
    %122 = vmatpush.msra.mxu0 0.0
    %123 = vmatpush.msra.mxu0 0.0
    %124 = vmatpush.msra.mxu0 0.0
    %125 = vmatpush.msra.mxu0 0.0
    %126 = vmatpush.msra.mxu0 0.0
    %127 = vmatpush.msra.mxu0 0.0
    %128 = vmatpush.msra.mxu0 0.0
    %129 = vmatpush.msra.mxu0 0.0
    %130 = vmatpush.msra.mxu0 0.0
    %131 = vmatpush.msra.mxu0 0.0
    %132 = vmatpush.msra.mxu0 0.0
    %133 = vmatpush.msra.mxu0 0.0
    %134 = vmatpush.msra.mxu0 0.0
    %135 = vmatpush.msra.mxu0 0.0
    %136 = vmatpush.msra.mxu0 %v89
    %137 = vmatpush.msra.mxu0 %v88
    %138 = vmatmul.f32.gmra.mxu0 %v120
    %v139 = vpop.f32.mrf.mxu0
    %v140 = vadd.f32 %v116, %v139
    %141 = vdwg.mxu0
    %v142 = vld [vmem:[%s5] sm:$0x1]
    %v144 = vperm.slane %v142, 0
    %v146 = vadd.f32 %v140, %v144
    %v147 = vxor.u32 %v146, 2147483648
    %v148 = vmul.f32 %v147, 1.442695
    %v149 = vpow.pop %v148
    %v150 = vadd.f32 %v149, 1.0
    %v151 = vrcp.pop %v150
    %v152 = vmul.f32 %v150, %v151
    %v153 = vsub.f32 1.0, %v152
    %v154 = vmul.f32 %v151, %v153
    %v155 = vadd.f32 %v151, %v154
    %vm156 = vweird.f32 %v150
    %vm157 = vweird.f32 %v151
    %vm158 = vmor %vm156, %vm157
    %v159 = vsel %vm158, %v151, %v155
    %v160 = vand.u32 2147483647, %v150
    %vm161 = vcmp.eq.f32.partialorder %v160, 8.507059e+37
    %v162 = vand.u32 %v150, 2147483648
    %v163 = vor.u32 1.1754944e-38, %v162
    %v164 = vsel %vm161, %v163, %v159
    %v165 = vmul.f32 1.0, %v164
    %s166 = scalar_lea.vmem [#allocation7], 16
    %v167 = vld [vmem:[%s166] sm:$0xff]
    %v168 = vld [vmem:[%s166 + $0x8] sm:$0xff]
    %s169 = scalar_lea.vmem [#allocation8], 32
    %v170 = vld [vmem:[%s169] sm:$0xff]
    %v171 = vld [vmem:[%s169 + $0x8] sm:$0xff]
    %v172 = vld [vmem:[%s169 + $0x10] sm:$0xff]
    %v173 = vld [vmem:[%s169 + $0x18] sm:$0xff]
    %174 = vmatpush.msra.mxu0 0.0
    %175 = vmatpush.msra.mxu0 0.0
    %176 = vmatpush.msra.mxu0 0.0
    %177 = vmatpush.msra.mxu0 0.0
    %178 = vmatpush.msra.mxu0 0.0
    %179 = vmatpush.msra.mxu0 0.0
    %180 = vmatpush.msra.mxu0 0.0
    %181 = vmatpush.msra.mxu0 0.0
    %182 = vmatpush.msra.mxu0 0.0
    %183 = vmatpush.msra.mxu0 0.0
    %184 = vmatpush.msra.mxu0 0.0
    %185 = vmatpush.msra.mxu0 0.0
    %186 = vmatpush.msra.mxu0 %v173
    %187 = vmatpush.msra.mxu0 %v172
    %188 = vmatpush.msra.mxu0 %v171
    %189 = vmatpush.msra.mxu0 %v170
    %190 = vmatmul.f32.gmra.mxu0 %v96
    %v191 = vpop.f32.mrf.mxu0
    %v192 = vadd.f32 0.0, %v191
    %193 = vdwg.mxu0
    %194 = vmatpush.msra.mxu0 0.0
    %195 = vmatpush.msra.mxu0 0.0
    %196 = vmatpush.msra.mxu0 0.0
    %197 = vmatpush.msra.mxu0 0.0
    %198 = vmatpush.msra.mxu0 0.0
    %199 = vmatpush.msra.mxu0 0.0
    %200 = vmatpush.msra.mxu0 0.0
    %201 = vmatpush.msra.mxu0 0.0
    %202 = vmatpush.msra.mxu0 0.0
    %203 = vmatpush.msra.mxu0 0.0
    %204 = vmatpush.msra.mxu0 0.0
    %205 = vmatpush.msra.mxu0 0.0
    %206 = vmatpush.msra.mxu0 0.0
    %207 = vmatpush.msra.mxu0 0.0
    %208 = vmatpush.msra.mxu0 %v168
    %209 = vmatpush.msra.mxu0 %v167
    %210 = vmatmul.f32.gmra.mxu0 %v120
    %v211 = vpop.f32.mrf.mxu0
    %v212 = vadd.f32 %v192, %v211
    %213 = vdwg.mxu0
    %s214 = scalar_lea.vmem %s5, 1
    %v215 = vld [vmem:[%s214] sm:$0x1]
    %v217 = vperm.slane %v215, 0
    %v219 = vadd.f32 %v212, %v217
    %v220 = vxor.u32 %v219, 2147483648
    %v221 = vmul.f32 %v220, 1.442695
    %v222 = vpow.pop %v221
    %v223 = vadd.f32 %v222, 1.0
    %v224 = vrcp.pop %v223
    %v225 = vmul.f32 %v223, %v224
    %v226 = vsub.f32 1.0, %v225
    %v227 = vmul.f32 %v224, %v226
    %v228 = vadd.f32 %v224, %v227
    %vm229 = vweird.f32 %v223
    %vm230 = vweird.f32 %v224
    %vm231 = vmor %vm229, %vm230
    %v232 = vsel %vm231, %v224, %v228
    %v233 = vand.u32 2147483647, %v223
    %vm234 = vcmp.eq.f32.partialorder %v233, 8.507059e+37
    %v235 = vand.u32 %v223, 2147483648
    %v236 = vor.u32 1.1754944e-38, %v235
    %v237 = vsel %vm234, %v236, %v232
    %v238 = vmul.f32 1.0, %v237
    %s239 = scalar_lea.vmem [#allocation7], 32
    %v240 = vld [vmem:[%s239] sm:$0xff]
    %v241 = vld [vmem:[%s239 + $0x8] sm:$0xff]
    %s242 = scalar_lea.vmem [#allocation8], 64
    %v243 = vld [vmem:[%s242] sm:$0xff]
    %v244 = vld [vmem:[%s242 + $0x8] sm:$0xff]
    %v245 = vld [vmem:[%s242 + $0x10] sm:$0xff]
    %v246 = vld [vmem:[%s242 + $0x18] sm:$0xff]
    %247 = vmatpush.msra.mxu0 0.0
    %248 = vmatpush.msra.mxu0 0.0
    %249 = vmatpush.msra.mxu0 0.0
    %250 = vmatpush.msra.mxu0 0.0
    %251 = vmatpush.msra.mxu0 0.0
    %252 = vmatpush.msra.mxu0 0.0
    %253 = vmatpush.msra.mxu0 0.0
    %254 = vmatpush.msra.mxu0 0.0
    %255 = vmatpush.msra.mxu0 0.0
    %256 = vmatpush.msra.mxu0 0.0
    %257 = vmatpush.msra.mxu0 0.0
    %258 = vmatpush.msra.mxu0 0.0
    %259 = vmatpush.msra.mxu0 %v246
    %260 = vmatpush.msra.mxu0 %v245
    %261 = vmatpush.msra.mxu0 %v244
    %262 = vmatpush.msra.mxu0 %v243
    %263 = vmatmul.f32.gmra.mxu0 %v96
    %v264 = vpop.f32.mrf.mxu0
    %v265 = vadd.f32 0.0, %v264
    %266 = vdwg.mxu0
    %267 = vmatpush.msra.mxu0 0.0
    %268 = vmatpush.msra.mxu0 0.0
    %269 = vmatpush.msra.mxu0 0.0
    %270 = vmatpush.msra.mxu0 0.0
    %271 = vmatpush.msra.mxu0 0.0
    %272 = vmatpush.msra.mxu0 0.0
    %273 = vmatpush.msra.mxu0 0.0
    %274 = vmatpush.msra.mxu0 0.0
    %275 = vmatpush.msra.mxu0 0.0
    %276 = vmatpush.msra.mxu0 0.0
    %277 = vmatpush.msra.mxu0 0.0
    %278 = vmatpush.msra.mxu0 0.0
    %279 = vmatpush.msra.mxu0 0.0
    %280 = vmatpush.msra.mxu0 0.0
    %281 = vmatpush.msra.mxu0 %v241
    %282 = vmatpush.msra.mxu0 %v240
    %283 = vmatmul.f32.gmra.mxu0 %v120
    %v284 = vpop.f32.mrf.mxu0
    %v285 = vadd.f32 %v265, %v284
    %286 = vdwg.mxu0
    %s287 = scalar_lea.vmem %s5, 2
    %v288 = vld [vmem:[%s287] sm:$0x1]
    %v290 = vperm.slane %v288, 0
    %v292 = vadd.f32 %v285, %v290
    %v293 = vtanh.pop %v292
    %s294 = scalar_lea.vmem [#allocation7], 48
    %v295 = vld [vmem:[%s294] sm:$0xff]
    %v296 = vld [vmem:[%s294 + $0x8] sm:$0xff]
    %s297 = scalar_lea.vmem [#allocation8], 96
    %v298 = vld [vmem:[%s297] sm:$0xff]
    %v299 = vld [vmem:[%s297 + $0x8] sm:$0xff]
    %v300 = vld [vmem:[%s297 + $0x10] sm:$0xff]
    %v301 = vld [vmem:[%s297 + $0x18] sm:$0xff]
    %302 = vmatpush.msra.mxu0 0.0
    %303 = vmatpush.msra.mxu0 0.0
    %304 = vmatpush.msra.mxu0 0.0
    %305 = vmatpush.msra.mxu0 0.0
    %306 = vmatpush.msra.mxu0 0.0
    %307 = vmatpush.msra.mxu0 0.0
    %308 = vmatpush.msra.mxu0 0.0
    %309 = vmatpush.msra.mxu0 0.0
    %310 = vmatpush.msra.mxu0 0.0
    %311 = vmatpush.msra.mxu0 0.0
    %312 = vmatpush.msra.mxu0 0.0
    %313 = vmatpush.msra.mxu0 0.0
    %314 = vmatpush.msra.mxu0 %v301
    %315 = vmatpush.msra.mxu0 %v300
    %316 = vmatpush.msra.mxu0 %v299
    %317 = vmatpush.msra.mxu0 %v298
    %318 = vmatmul.f32.gmra.mxu0 %v96
    %v319 = vpop.f32.mrf.mxu0
    %v320 = vadd.f32 0.0, %v319
    %321 = vdwg.mxu0
    %322 = vmatpush.msra.mxu0 0.0
    %323 = vmatpush.msra.mxu0 0.0
    %324 = vmatpush.msra.mxu0 0.0
    %325 = vmatpush.msra.mxu0 0.0
    %326 = vmatpush.msra.mxu0 0.0
    %327 = vmatpush.msra.mxu0 0.0
    %328 = vmatpush.msra.mxu0 0.0
    %329 = vmatpush.msra.mxu0 0.0
    %330 = vmatpush.msra.mxu0 0.0
    %331 = vmatpush.msra.mxu0 0.0
    %332 = vmatpush.msra.mxu0 0.0
    %333 = vmatpush.msra.mxu0 0.0
    %334 = vmatpush.msra.mxu0 0.0
    %335 = vmatpush.msra.mxu0 0.0
    %336 = vmatpush.msra.mxu0 %v296
    %337 = vmatpush.msra.mxu0 %v295
    %338 = vmatmul.f32.gmra.mxu0 %v120
    %v339 = vpop.f32.mrf.mxu0
    %v340 = vadd.f32 %v320, %v339
    %341 = vdwg.mxu0
    %s342 = scalar_lea.vmem %s5, 3
    %v343 = vld [vmem:[%s342] sm:$0x1]
    %v345 = vperm.slane %v343, 0
    %v347 = vadd.f32 %v340, %v345
    %v348 = vxor.u32 %v347, 2147483648
    %v349 = vmul.f32 %v348, 1.442695
    %v350 = vpow.pop %v349
    %v351 = vadd.f32 %v350, 1.0
    %v352 = vrcp.pop %v351
    %v353 = vmul.f32 %v351, %v352
    %v354 = vsub.f32 1.0, %v353
    %v355 = vmul.f32 %v352, %v354
    %v356 = vadd.f32 %v352, %v355
    %vm357 = vweird.f32 %v351
    %vm358 = vweird.f32 %v352
    %vm359 = vmor %vm357, %vm358
    %v360 = vsel %vm359, %v352, %v356
    %v361 = vand.u32 2147483647, %v351
    %vm362 = vcmp.eq.f32.partialorder %v361, 8.507059e+37
    %v363 = vand.u32 %v351, 2147483648
    %v364 = vor.u32 1.1754944e-38, %v363
    %v365 = vsel %vm362, %v364, %v360
    %v366 = vmul.f32 1.0, %v365
    %v367 = vld [vmem:[#allocation5] sm:$0x3]
    %v368 = vmul.f32 %v238, %v367
    %v369 = vmul.f32 %v165, %v293
    %v370 = vadd.f32 %v368, %v369
    %v371 = vtanh.pop %v370
    %v372 = vmul.f32 %v366, %v371
    %vm373 = vcmask 254976
    %374 = vst.msk [vmem:[#allocation10] sm:$0x3] %vm373, %v372
    %375 = vst.msk [vmem:[#allocation11] sm:$0x3] %vm373, %v370
    // Predicated region
    $region42: #{lstm_cell.1} parent=1 // pred_check
      _
    $region43: #{lstm_cell.1} parent=1 // pred_check_branch
      %377 = sbr.rel (0) target = $region45
    $region44: #{lstm_cell.1} parent=1 // pred_region
      %379 = vsyncadd [#allocation4], 0
      %s381 = sshll.u32 [#allocation10], 4
      %s382 = int_to_ptr.vmem [resolvable:$true] %s381
      %s383 = sshll.u32 %s6, 4
      %s384 = int_to_ptr.hbm [resolvable:$true] %s383
      %386 = dma.vmem_to_hbm [thread:$0]  %s382, 32, %s384, [#allocation4]
    $region45: #{lstm_cell.1} parent=1 // pred_fallthru
      _
    // Predicated region
    $region46: #{lstm_cell.1} parent=1 // pred_check
      _
    $region47: #{lstm_cell.1} parent=1 // pred_check_branch
      %388 = sbr.rel (0) target = $region49
    $region48: #{lstm_cell.1} parent=1 // pred_region
      %390 = vsyncadd [#allocation12], 0
      %s392 = sshll.u32 [#allocation11], 4
      %s393 = int_to_ptr.vmem [resolvable:$true] %s392
      %s394 = sshll.u32 %s7, 4
      %s395 = int_to_ptr.hbm [resolvable:$true] %s394
      %397 = dma.vmem_to_hbm [thread:$0]  %s393, 32, %s395, [#allocation12]
    $region49: #{lstm_cell.1} parent=1 // pred_fallthru
      _
    // Predicated region
    $region50: #{lstm_cell.1} parent=1 // pred_check
      _
    $region51: #{lstm_cell.1} parent=1 // pred_check_branch
      %399 = sbr.rel (0) target = $region53
    $region52: #{lstm_cell.1} parent=1 // pred_region
      %401 = dma.done [#allocation4], 32
    $region53: #{lstm_cell.1} parent=1 // pred_fallthru
      _
    // Predicated region
    $region54: #{lstm_cell.1} parent=1 // pred_check
      _
    $region55: #{lstm_cell.1} parent=1 // pred_check_branch
      %403 = sbr.rel (0) target = $region57
    $region56: #{lstm_cell.1} parent=1 // pred_region
      %405 = dma.done [#allocation12], 32
    $region57: #{lstm_cell.1} parent=1 // pred_fallthru
      _
    %406 = vsyncpa [#allocation3], 1
    %407 = vsyncpa [#allocation6], 1
    %408 = vsyncpa [#allocation9], 1
    %409 = vsyncpa [#allocation4], 1
    %410 = vsyncpa [#allocation12], 1

</llo_original>
